<compile_context>
chip_gen: v7x
topology: tpu7x:2x2x1
jax: 0.10.0
libtpu: 0.0.40
codegen_flags: <defaults>
</compile_context>

<pallas_src>
import functools

import jax
import jax.numpy as jnp
from jax.experimental import pallas as pl
from jax.experimental.pallas import tpu as pltpu


def _round_up(x, m):
    return (x + m - 1) // m * m


# -----------------------------------------------------------------------------
# Fused kernel: normalize query + cosine sim + top-k + prompt gather
# -----------------------------------------------------------------------------
def _prompt_pool_kernel(P, K, LD, mxu_dtype,
                        q_ref, key_ref, pool_ref,
                        sim_ref, tks_ref, sel_ref):
    q = q_ref[...].astype(jnp.float32)        # [TB, D]

    # F.normalize(q, p=2, dim=1) = q / max(||q||, 1e-12)
    #                            = q * rsqrt(max(||q||^2, 1e-24))   (EUP rsqrt)
    q_n = q * jax.lax.rsqrt(jnp.maximum(jnp.sum(q * q, -1, keepdims=True), 1e-24))

    # Keys are pre-normalized / pre-cast / zero-padded in the wrapper.
    k_n = key_ref[...]                        # [P_pad, D], mxu_dtype

    # similarity = q_norm @ key_norm.T  (contract on embed dim, MXU)
    sim = jax.lax.dot_general(
        q_n.astype(mxu_dtype), k_n,
        (((1,), (1,)), ((), ())),
        preferred_element_type=jnp.float32)   # [TB, P_pad]
    sim_ref[...] = sim                        # full-width (lane-dense) store

    TB, P_pad = sim.shape
    col_pp = jax.lax.broadcasted_iota(jnp.int32, (TB, P_pad), 1)
    col_p = jax.lax.broadcasted_iota(jnp.int32, (TB, P), 1)

    pool = pool_ref[...]                      # [P, LD] native dtype (no cast)

    # smallest distance (1 - sim) == largest similarity: iterate on sim directly
    neg_inf = jnp.float32(-jnp.inf)
    work = jnp.where(col_pp < P, sim, neg_inf)      # mask padded key columns
    for j in range(K):                               # K is small & static
        m = jnp.max(work, axis=-1, keepdims=True)    # selected similarity [TB,1]
        cand = jnp.where(work == m, col_pp, jnp.int32(P_pad))
        idx = jnp.min(cand, axis=-1, keepdims=True)  # first occurrence (argmax)
        tks_ref[:, j:j + 1] = m                      # narrow column store
        # Exact gather: 0/1 one-hot (pool dtype) [TB, P] @ pool [P, LD], f32 acc.
        onehot = (col_p == idx).astype(pool.dtype)
        gathered = jnp.dot(onehot, pool, preferred_element_type=jnp.float32)
        sel_ref[:, j * LD:(j + 1) * LD] = gathered.astype(sel_ref.dtype)
        work = jnp.where(col_pp == idx, neg_inf, work)   # exclude picked column


# -----------------------------------------------------------------------------
# Wrapper: padding / tiling / VMEM plumbing, reshape to module output layout
# -----------------------------------------------------------------------------
def prompt_pool_forward(query, prompt_pool, prompt_key, top_k,
                        *, block_b=128, mxu_dtype=None,
                        vmem_budget_bytes=40 << 20):
    B, D = query.shape
    P, L, Dp = prompt_pool.shape
    assert Dp == D and prompt_key.shape == (P, D)
    assert top_k <= P, "top_k must be <= pool_size"
    K = top_k
    LD = L * D

    # f32 MXU inputs => exact parity with the f32 PyTorch module.
    # Use jnp.bfloat16 on v6e/v7x for realistic D (query normalization stays f32).
    if mxu_dtype is None:
        mxu_dtype = jnp.float32

    out_dtype = prompt_pool.dtype     # bf16 pool -> bf16 selected_prompts (halves writeback)
    P_pad = _round_up(P, 128)         # lane-dense similarity output
    K_pad = _round_up(K, 128)         # lane-dense top-k similarity output

    # Grid-invariant key normalization hoisted out of the kernel (runs once).
    kn = prompt_key.astype(jnp.float32)
    kn = kn / jnp.maximum(jnp.linalg.norm(kn, axis=1, keepdims=True), 1e-12)
    key_pad = jnp.pad(kn.astype(mxu_dtype), ((0, P_pad - P), (0, 0)))
    pool_2d = prompt_pool.reshape(P, LD)

    # Batch tile: guarantee >=2 grid steps when B is large (v7x megacore), then
    # shrink until the double-buffered working set fits the VMEM budget.
    if B <= 8:
        TB = B
    else:
        TB = min(block_b, _round_up(-(-B // 2), 8))

    def _itemsize(dt):
        return jnp.dtype(dt).itemsize

    def _tile_bytes(tb):
        per_step = (tb * D * _itemsize(query.dtype)          # query tile
                    + tb * P_pad * 4                         # similarity out
                    + tb * K_pad * 4                         # top-k sim out
                    + tb * K * LD * _itemsize(out_dtype))    # selected prompts out
        resident = (P_pad * D * _itemsize(mxu_dtype)         # keys
                    + P * LD * _itemsize(out_dtype))         # pool
        return 2 * per_step + 2 * resident                   # double-buffered

    while TB > 8 and _tile_bytes(TB) > vmem_budget_bytes:
        TB = max(8, _round_up(TB // 2, 8))
    grid = (pl.cdiv(B, TB),)
    vmem_limit = int(min(64 << 20, max(_tile_bytes(TB) + (8 << 20), 32 << 20)))

    kernel = functools.partial(_prompt_pool_kernel, P, K, LD, mxu_dtype)
    sim_pad, tks_pad, sel_flat = pl.pallas_call(
        kernel,
        grid=grid,
        out_shape=(
            jax.ShapeDtypeStruct((B, P_pad), jnp.float32),    # similarity (padded)
            jax.ShapeDtypeStruct((B, K_pad), jnp.float32),    # top-k sim (padded)
            jax.ShapeDtypeStruct((B, K * LD), out_dtype),     # selected prompts
        ),
        in_specs=[
            pl.BlockSpec((TB, D), lambda b: (b, 0)),          # query tile
            pl.BlockSpec((P_pad, D), lambda b: (0, 0)),       # keys: VMEM-resident
            pl.BlockSpec((P, LD), lambda b: (0, 0)),          # pool: VMEM-resident
        ],
        out_specs=(
            pl.BlockSpec((TB, P_pad), lambda b: (b, 0)),
            pl.BlockSpec((TB, K_pad), lambda b: (b, 0)),
            pl.BlockSpec((TB, K * LD), lambda b: (b, 0)),
        ),
        compiler_params=pltpu.CompilerParams(
            dimension_semantics=("parallel",),
            vmem_limit_bytes=vmem_limit),
    )(query, key_pad, pool_2d)

    similarity = sim_pad[:, :P]
    top_k_similarity = tks_pad[:, :K]
    # [B, K*L*D] -> [B, K*L, D]  (matches .view in the PyTorch module)
    selected_prompts = sel_flat.reshape(B, K * L, D)
    return selected_prompts, similarity, top_k_similarity


# -----------------------------------------------------------------------------
# Pure-JAX reference for sanity checking
# -----------------------------------------------------------------------------
def prompt_pool_forward_ref(query, prompt_pool, prompt_key, top_k):
    qn = query / jnp.maximum(jnp.linalg.norm(query, axis=1, keepdims=True), 1e-12)
    kn = prompt_key / jnp.maximum(
        jnp.linalg.norm(prompt_key, axis=1, keepdims=True), 1e-12)
    sim = qn @ kn.T
    # smallest distance == largest similarity (no frequency penalty)
    tks, idx = jax.lax.top_k(sim, top_k)
    selected = prompt_pool[idx]  # [B, K, L, D]
    B = query.shape[0]
    L, D = prompt_pool.shape[1], prompt_pool.shape[2]
    return selected.reshape(B, top_k * L, D), sim, tks


if __name__ == "__main__":
    # Small, deterministic config
    B = 2          # batch
    D = 32         # embed_dim
    P = 16         # pool_size
    L = 8          # prompt_length
    K = 5          # top_k

    key = jax.random.PRNGKey(0)
    k_q, k_pool, k_key = jax.random.split(key, 3)

    query = jax.random.normal(k_q, (B, D), dtype=jnp.float32)
    # prompt_pool init: normal(std=0.02); prompt_key init: uniform(-0.1, 0.1)
    prompt_pool = 0.02 * jax.random.normal(k_pool, (P, L, D), dtype=jnp.float32)
    prompt_key = jax.random.uniform(
        k_key, (P, D), minval=-0.1, maxval=0.1, dtype=jnp.float32)

    selected, sim, tks = prompt_pool_forward(query, prompt_pool, prompt_key, K)
    jax.block_until_ready((selected, sim, tks))

    sel_ref, sim_ref, tks_ref = prompt_pool_forward_ref(
        query, prompt_pool, prompt_key, K)

    assert selected.shape == (B, K * L, D)
    assert sim.shape == (B, P)
    assert tks.shape == (B, K)
    assert jnp.allclose(sim, sim_ref, atol=1e-5)
    assert jnp.allclose(tks, tks_ref, atol=1e-5)
    assert jnp.allclose(selected, sel_ref, atol=1e-5)

    print("KERNEL_OK")
</pallas_src>

<mosaic_0001>
module attributes {stable_mosaic.version = 11 : i64} {
  func.func @_prompt_pool_kernel(%arg0: i32, %arg1: memref<2x32xf32, #tpu.memory_space<vmem>>, %arg2: memref<128x32xf32, #tpu.memory_space<vmem>>, %arg3: memref<16x256xf32, #tpu.memory_space<vmem>>, %arg4: memref<2x128xf32, #tpu.memory_space<vmem>>, %arg5: memref<2x128xf32, #tpu.memory_space<vmem>>, %arg6: memref<2x1280xf32, #tpu.memory_space<vmem>>) attributes {dimension_semantics = [#tpu.dimension_semantics<parallel>], iteration_bounds = array<i64: 1>, scalar_prefetch = 0 : i64, scratch_operands = 0 : i64, tpu.core_type = #tpu.core_type<tc>, window_params = [{transform_indices = @transform_0, window_bounds = array<i64: 2, 32>}, {pipeline_mode = #tpu.pipeline_mode<synchronous>, transform_indices = @transform_1, window_bounds = array<i64: 128, 32>}, {pipeline_mode = #tpu.pipeline_mode<synchronous>, transform_indices = @transform_2, window_bounds = array<i64: 16, 256>}, {transform_indices = @transform_3, window_bounds = array<i64: 2, 128>}, {transform_indices = @transform_4, window_bounds = array<i64: 2, 128>}, {transform_indices = @transform_5, window_bounds = array<i64: 2, 1280>}]} {
    %c0 = arith.constant 0 : index
    %c0_0 = arith.constant 0 : index
    %0 = vector.load %arg1[%c0, %c0_0] : memref<2x32xf32, #tpu.memory_space<vmem>>, vector<2x32xf32>
    %1 = arith.mulf %0, %0 : vector<2x32xf32>
    %cst = arith.constant dense<0.000000e+00> : vector<2xf32>
    %2 = vector.multi_reduction <add>, %1, %cst [1] : vector<2x32xf32> to vector<2xf32>
    %3 = vector.shape_cast %2 : vector<2xf32> to vector<2x1xf32>
    %cst_1 = arith.constant 1.000000e-24 : f32
    %4 = vector.broadcast %cst_1 : f32 to vector<2x1xf32>
    %5 = arith.maximumf %3, %4 : vector<2x1xf32>
    %6 = math.rsqrt %5 : vector<2x1xf32>
    %7 = vector.broadcast %6 : vector<2x1xf32> to vector<2x32xf32>
    %8 = arith.mulf %0, %7 : vector<2x32xf32>
    %c0_2 = arith.constant 0 : index
    %c0_3 = arith.constant 0 : index
    %9 = vector.load %arg2[%c0_2, %c0_3] : memref<128x32xf32, #tpu.memory_space<vmem>>, vector<128x32xf32>
    %cst_4 = arith.constant dense<0.000000e+00> : vector<2x128xf32>
    %10 = tpu.matmul %8, %9, %cst_4 {dimension_numbers = #tpu.dot_dimension_numbers<[1], [1], [0], [0], [0, 0, 1, 0], [], []>} : vector<2x32xf32>, vector<128x32xf32>, vector<2x128xf32> -> vector<2x128xf32>
    %c0_5 = arith.constant 0 : index
    %c0_6 = arith.constant 0 : index
    %11 = vector.load %arg4[%c0_5, %c0_6] : memref<2x128xf32, #tpu.memory_space<vmem>>, vector<2x128xf32>
    tpu.vector_store %arg4[%c0_5, %c0_6], %10 {strides = array<i32>} : memref<2x128xf32, #tpu.memory_space<vmem>>, vector<2x128xf32>,
    %12 = tpu.iota {dimensions = array<i32: 1>} : vector<2x128xi32>
    %13 = tpu.iota {dimensions = array<i32: 1>} : vector<2x16xi32>
    %c0_7 = arith.constant 0 : index
    %c0_8 = arith.constant 0 : index
    %14 = vector.load %arg3[%c0_7, %c0_8] : memref<16x256xf32, #tpu.memory_space<vmem>>, vector<16x256xf32>
    %c16_i32 = arith.constant 16 : i32
    %15 = vector.broadcast %c16_i32 : i32 to vector<2x128xi32>
    %16 = arith.cmpi slt, %12, %15 : vector<2x128xi32>
    %cst_9 = arith.constant 0xFF800000 : f32
    %17 = vector.broadcast %cst_9 : f32 to vector<2x128xf32>
    %18 = arith.select %16, %10, %17 : vector<2x128xi1>, vector<2x128xf32>
    %cst_10 = arith.constant dense<0xFF800000> : vector<2xf32>
    %19 = vector.multi_reduction <maximumf>, %18, %cst_10 [1] : vector<2x128xf32> to vector<2xf32>
    %20 = vector.shape_cast %19 : vector<2xf32> to vector<2x1xf32>
    %21 = vector.broadcast %20 : vector<2x1xf32> to vector<2x128xf32>
    %22 = arith.cmpf oeq, %18, %21 : vector<2x128xf32>
    %c128_i32 = arith.constant 128 : i32
    %23 = vector.broadcast %c128_i32 : i32 to vector<2x128xi32>
    %24 = arith.select %22, %12, %23 : vector<2x128xi1>, vector<2x128xi32>
    %cst_11 = arith.constant dense<2147483647> : vector<2xi32>
    %25 = vector.multi_reduction <minsi>, %24, %cst_11 [1] : vector<2x128xi32> to vector<2xi32>
    %26 = vector.shape_cast %25 : vector<2xi32> to vector<2x1xi32>
    %c0_12 = arith.constant 0 : index
    %c0_13 = arith.constant 0 : index
    %27 = vector.load %arg5[%c0_12, %c0_13] : memref<2x128xf32, #tpu.memory_space<vmem>>, vector<2x1xf32>
    tpu.vector_store %arg5[%c0_12, %c0_13], %20 {strides = array<i32>} : memref<2x128xf32, #tpu.memory_space<vmem>>, vector<2x1xf32>,
    %28 = vector.broadcast %26 : vector<2x1xi32> to vector<2x16xi32>
    %29 = arith.cmpi eq, %13, %28 : vector<2x16xi32>
    %30 = arith.extui %29 : vector<2x16xi1> to vector<2x16xi32>
    %31 = arith.sitofp %30 : vector<2x16xi32> to vector<2x16xf32>
    %cst_14 = arith.constant dense<0.000000e+00> : vector<2x256xf32>
    %32 = tpu.matmul %31, %14, %cst_14 {dimension_numbers = #tpu.dot_dimension_numbers<[1], [0], [0], [1], [0, 0, 1, 1], [], []>} : vector<2x16xf32>, vector<16x256xf32>, vector<2x256xf32> -> vector<2x256xf32>
    %c0_15 = arith.constant 0 : index
    %c0_16 = arith.constant 0 : index
    %33 = vector.load %arg6[%c0_15, %c0_16] : memref<2x1280xf32, #tpu.memory_space<vmem>>, vector<2x256xf32>
    tpu.vector_store %arg6[%c0_15, %c0_16], %32 {strides = array<i32>} : memref<2x1280xf32, #tpu.memory_space<vmem>>, vector<2x256xf32>,
    %34 = vector.broadcast %26 : vector<2x1xi32> to vector<2x128xi32>
    %35 = arith.cmpi eq, %12, %34 : vector<2x128xi32>
    %cst_17 = arith.constant 0xFF800000 : f32
    %36 = vector.broadcast %cst_17 : f32 to vector<2x128xf32>
    %37 = arith.select %35, %36, %18 : vector<2x128xi1>, vector<2x128xf32>
    %cst_18 = arith.constant dense<0xFF800000> : vector<2xf32>
    %38 = vector.multi_reduction <maximumf>, %37, %cst_18 [1] : vector<2x128xf32> to vector<2xf32>
    %39 = vector.shape_cast %38 : vector<2xf32> to vector<2x1xf32>
    %40 = vector.broadcast %39 : vector<2x1xf32> to vector<2x128xf32>
    %41 = arith.cmpf oeq, %37, %40 : vector<2x128xf32>
    %c128_i32_19 = arith.constant 128 : i32
    %42 = vector.broadcast %c128_i32_19 : i32 to vector<2x128xi32>
    %43 = arith.select %41, %12, %42 : vector<2x128xi1>, vector<2x128xi32>
    %cst_20 = arith.constant dense<2147483647> : vector<2xi32>
    %44 = vector.multi_reduction <minsi>, %43, %cst_20 [1] : vector<2x128xi32> to vector<2xi32>
    %45 = vector.shape_cast %44 : vector<2xi32> to vector<2x1xi32>
    %c0_21 = arith.constant 0 : index
    %c1 = arith.constant 1 : index
    %46 = vector.load %arg5[%c0_21, %c1] : memref<2x128xf32, #tpu.memory_space<vmem>>, vector<2x1xf32>
    tpu.vector_store %arg5[%c0_21, %c1], %39 {strides = array<i32>} : memref<2x128xf32, #tpu.memory_space<vmem>>, vector<2x1xf32>,
    %47 = vector.broadcast %45 : vector<2x1xi32> to vector<2x16xi32>
    %48 = arith.cmpi eq, %13, %47 : vector<2x16xi32>
    %49 = arith.extui %48 : vector<2x16xi1> to vector<2x16xi32>
    %50 = arith.sitofp %49 : vector<2x16xi32> to vector<2x16xf32>
    %cst_22 = arith.constant dense<0.000000e+00> : vector<2x256xf32>
    %51 = tpu.matmul %50, %14, %cst_22 {dimension_numbers = #tpu.dot_dimension_numbers<[1], [0], [0], [1], [0, 0, 1, 1], [], []>} : vector<2x16xf32>, vector<16x256xf32>, vector<2x256xf32> -> vector<2x256xf32>
    %c0_23 = arith.constant 0 : index
    %c256 = arith.constant 256 : index
    %52 = vector.load %arg6[%c0_23, %c256] : memref<2x1280xf32, #tpu.memory_space<vmem>>, vector<2x256xf32>
    tpu.vector_store %arg6[%c0_23, %c256], %51 {strides = array<i32>} : memref<2x1280xf32, #tpu.memory_space<vmem>>, vector<2x256xf32>,
    %53 = vector.broadcast %45 : vector<2x1xi32> to vector<2x128xi32>
    %54 = arith.cmpi eq, %12, %53 : vector<2x128xi32>
    %cst_24 = arith.constant 0xFF800000 : f32
    %55 = vector.broadcast %cst_24 : f32 to vector<2x128xf32>
    %56 = arith.select %54, %55, %37 : vector<2x128xi1>, vector<2x128xf32>
    %cst_25 = arith.constant dense<0xFF800000> : vector<2xf32>
    %57 = vector.multi_reduction <maximumf>, %56, %cst_25 [1] : vector<2x128xf32> to vector<2xf32>
    %58 = vector.shape_cast %57 : vector<2xf32> to vector<2x1xf32>
    %59 = vector.broadcast %58 : vector<2x1xf32> to vector<2x128xf32>
    %60 = arith.cmpf oeq, %56, %59 : vector<2x128xf32>
    %c128_i32_26 = arith.constant 128 : i32
    %61 = vector.broadcast %c128_i32_26 : i32 to vector<2x128xi32>
    %62 = arith.select %60, %12, %61 : vector<2x128xi1>, vector<2x128xi32>
    %cst_27 = arith.constant dense<2147483647> : vector<2xi32>
    %63 = vector.multi_reduction <minsi>, %62, %cst_27 [1] : vector<2x128xi32> to vector<2xi32>
    %64 = vector.shape_cast %63 : vector<2xi32> to vector<2x1xi32>
    %c0_28 = arith.constant 0 : index
    %c2 = arith.constant 2 : index
    %65 = vector.load %arg5[%c0_28, %c2] : memref<2x128xf32, #tpu.memory_space<vmem>>, vector<2x1xf32>
    tpu.vector_store %arg5[%c0_28, %c2], %58 {strides = array<i32>} : memref<2x128xf32, #tpu.memory_space<vmem>>, vector<2x1xf32>,
    %66 = vector.broadcast %64 : vector<2x1xi32> to vector<2x16xi32>
    %67 = arith.cmpi eq, %13, %66 : vector<2x16xi32>
    %68 = arith.extui %67 : vector<2x16xi1> to vector<2x16xi32>
    %69 = arith.sitofp %68 : vector<2x16xi32> to vector<2x16xf32>
    %cst_29 = arith.constant dense<0.000000e+00> : vector<2x256xf32>
    %70 = tpu.matmul %69, %14, %cst_29 {dimension_numbers = #tpu.dot_dimension_numbers<[1], [0], [0], [1], [0, 0, 1, 1], [], []>} : vector<2x16xf32>, vector<16x256xf32>, vector<2x256xf32> -> vector<2x256xf32>
    %c0_30 = arith.constant 0 : index
    %c512 = arith.constant 512 : index
    %71 = vector.load %arg6[%c0_30, %c512] : memref<2x1280xf32, #tpu.memory_space<vmem>>, vector<2x256xf32>
    tpu.vector_store %arg6[%c0_30, %c512], %70 {strides = array<i32>} : memref<2x1280xf32, #tpu.memory_space<vmem>>, vector<2x256xf32>,
    %72 = vector.broadcast %64 : vector<2x1xi32> to vector<2x128xi32>
    %73 = arith.cmpi eq, %12, %72 : vector<2x128xi32>
    %cst_31 = arith.constant 0xFF800000 : f32
    %74 = vector.broadcast %cst_31 : f32 to vector<2x128xf32>
    %75 = arith.select %73, %74, %56 : vector<2x128xi1>, vector<2x128xf32>
    %cst_32 = arith.constant dense<0xFF800000> : vector<2xf32>
    %76 = vector.multi_reduction <maximumf>, %75, %cst_32 [1] : vector<2x128xf32> to vector<2xf32>
    %77 = vector.shape_cast %76 : vector<2xf32> to vector<2x1xf32>
    %78 = vector.broadcast %77 : vector<2x1xf32> to vector<2x128xf32>
    %79 = arith.cmpf oeq, %75, %78 : vector<2x128xf32>
    %c128_i32_33 = arith.constant 128 : i32
    %80 = vector.broadcast %c128_i32_33 : i32 to vector<2x128xi32>
    %81 = arith.select %79, %12, %80 : vector<2x128xi1>, vector<2x128xi32>
    %cst_34 = arith.constant dense<2147483647> : vector<2xi32>
    %82 = vector.multi_reduction <minsi>, %81, %cst_34 [1] : vector<2x128xi32> to vector<2xi32>
    %83 = vector.shape_cast %82 : vector<2xi32> to vector<2x1xi32>
    %c0_35 = arith.constant 0 : index
    %c3 = arith.constant 3 : index
    %84 = vector.load %arg5[%c0_35, %c3] : memref<2x128xf32, #tpu.memory_space<vmem>>, vector<2x1xf32>
    tpu.vector_store %arg5[%c0_35, %c3], %77 {strides = array<i32>} : memref<2x128xf32, #tpu.memory_space<vmem>>, vector<2x1xf32>,
    %85 = vector.broadcast %83 : vector<2x1xi32> to vector<2x16xi32>
    %86 = arith.cmpi eq, %13, %85 : vector<2x16xi32>
    %87 = arith.extui %86 : vector<2x16xi1> to vector<2x16xi32>
    %88 = arith.sitofp %87 : vector<2x16xi32> to vector<2x16xf32>
    %cst_36 = arith.constant dense<0.000000e+00> : vector<2x256xf32>
    %89 = tpu.matmul %88, %14, %cst_36 {dimension_numbers = #tpu.dot_dimension_numbers<[1], [0], [0], [1], [0, 0, 1, 1], [], []>} : vector<2x16xf32>, vector<16x256xf32>, vector<2x256xf32> -> vector<2x256xf32>
    %c0_37 = arith.constant 0 : index
    %c768 = arith.constant 768 : index
    %90 = vector.load %arg6[%c0_37, %c768] : memref<2x1280xf32, #tpu.memory_space<vmem>>, vector<2x256xf32>
    tpu.vector_store %arg6[%c0_37, %c768], %89 {strides = array<i32>} : memref<2x1280xf32, #tpu.memory_space<vmem>>, vector<2x256xf32>,
    %91 = vector.broadcast %83 : vector<2x1xi32> to vector<2x128xi32>
    %92 = arith.cmpi eq, %12, %91 : vector<2x128xi32>
    %cst_38 = arith.constant 0xFF800000 : f32
    %93 = vector.broadcast %cst_38 : f32 to vector<2x128xf32>
    %94 = arith.select %92, %93, %75 : vector<2x128xi1>, vector<2x128xf32>
    %cst_39 = arith.constant dense<0xFF800000> : vector<2xf32>
    %95 = vector.multi_reduction <maximumf>, %94, %cst_39 [1] : vector<2x128xf32> to vector<2xf32>
    %96 = vector.shape_cast %95 : vector<2xf32> to vector<2x1xf32>
    %97 = vector.broadcast %96 : vector<2x1xf32> to vector<2x128xf32>
    %98 = arith.cmpf oeq, %94, %97 : vector<2x128xf32>
    %c128_i32_40 = arith.constant 128 : i32
    %99 = vector.broadcast %c128_i32_40 : i32 to vector<2x128xi32>
    %100 = arith.select %98, %12, %99 : vector<2x128xi1>, vector<2x128xi32>
    %cst_41 = arith.constant dense<2147483647> : vector<2xi32>
    %101 = vector.multi_reduction <minsi>, %100, %cst_41 [1] : vector<2x128xi32> to vector<2xi32>
    %102 = vector.shape_cast %101 : vector<2xi32> to vector<2x1xi32>
    %c0_42 = arith.constant 0 : index
    %c4 = arith.constant 4 : index
    %103 = vector.load %arg5[%c0_42, %c4] : memref<2x128xf32, #tpu.memory_space<vmem>>, vector<2x1xf32>
    tpu.vector_store %arg5[%c0_42, %c4], %96 {strides = array<i32>} : memref<2x128xf32, #tpu.memory_space<vmem>>, vector<2x1xf32>,
    %104 = vector.broadcast %102 : vector<2x1xi32> to vector<2x16xi32>
    %105 = arith.cmpi eq, %13, %104 : vector<2x16xi32>
    %106 = arith.extui %105 : vector<2x16xi1> to vector<2x16xi32>
    %107 = arith.sitofp %106 : vector<2x16xi32> to vector<2x16xf32>
    %cst_43 = arith.constant dense<0.000000e+00> : vector<2x256xf32>
    %108 = tpu.matmul %107, %14, %cst_43 {dimension_numbers = #tpu.dot_dimension_numbers<[1], [0], [0], [1], [0, 0, 1, 1], [], []>} : vector<2x16xf32>, vector<16x256xf32>, vector<2x256xf32> -> vector<2x256xf32>
    %c0_44 = arith.constant 0 : index
    %c1024 = arith.constant 1024 : index
    %109 = vector.load %arg6[%c0_44, %c1024] : memref<2x1280xf32, #tpu.memory_space<vmem>>, vector<2x256xf32>
    tpu.vector_store %arg6[%c0_44, %c1024], %108 {strides = array<i32>} : memref<2x1280xf32, #tpu.memory_space<vmem>>, vector<2x256xf32>,
    return
  }
  func.func @transform_0(%arg0: i32) -> (i32, i32) {
    %c0_i32 = arith.constant 0 : i32
    %c0_i32_0 = arith.constant 0 : i32
    return %arg0, %c0_i32 : i32, i32
  }
  func.func @transform_1(%arg0: i32) -> (i32, i32) {
    %c0_i32 = arith.constant 0 : i32
    %c0_i32_0 = arith.constant 0 : i32
    %c0_i32_1 = arith.constant 0 : i32
    return %c0_i32, %c0_i32_0 : i32, i32
  }
  func.func @transform_2(%arg0: i32) -> (i32, i32) {
    %c0_i32 = arith.constant 0 : i32
    %c0_i32_0 = arith.constant 0 : i32
    %c0_i32_1 = arith.constant 0 : i32
    return %c0_i32, %c0_i32_0 : i32, i32
  }
  func.func @transform_3(%arg0: i32) -> (i32, i32) {
    %c0_i32 = arith.constant 0 : i32
    %c0_i32_0 = arith.constant 0 : i32
    return %arg0, %c0_i32 : i32, i32
  }
  func.func @transform_4(%arg0: i32) -> (i32, i32) {
    %c0_i32 = arith.constant 0 : i32
    %c0_i32_0 = arith.constant 0 : i32
    return %arg0, %c0_i32 : i32, i32
  }
  func.func @transform_5(%arg0: i32) -> (i32, i32) {
    %c0_i32 = arith.constant 0 : i32
    %c0_i32_0 = arith.constant 0 : i32
    return %arg0, %c0_i32 : i32, i32
  }
}

</mosaic_0001>

<llo_original>
// kernel: tpu_custom_call.1
$region0: #{tpu_custom_call.1}
  #allocation0 [shape = 'u32[]', space=smem, size = 0x4, offset = 0x4, fixed_abs, tag = 'smem constant byte address 0x4 - core index']
  #allocation1 [shape = 'u32[144,128]{1,0:T(1,128)}', space=vmem, size = 0x12000, scoped, tag = 'internal scratch']
  %s0 = inlined_call_operand.vmem [shape: f32[2,32], index: 0, kind: input, shape index: {}]
  %s1 = inlined_call_operand.vmem [shape: f32[128,32], index: 1, kind: input, shape index: {}]
  %s2 = inlined_call_operand.vmem [shape: f32[16,256], index: 2, kind: input, shape index: {}]
  %s3 = inlined_call_operand.hbm [shape: f32[2,128], index: 3, kind: output, shape index: {0}]
  %s4 = inlined_call_operand.hbm [shape: f32[2,128], index: 4, kind: output, shape index: {1}]
  %s5 = inlined_call_operand.hbm [shape: f32[2,1280], index: 5, kind: output, shape index: {2}]
  %6 = xla_tuple %s3, %s4, %s5
  %s7 = sld [smem:[#allocation0]]
  $region38: #{tpu_custom_call.1} parent=0
    _
  %s9 = ssub.s32 1, %s7
  %s10 = scalar_select 0, %s9, %s7
  $region1: #{tpu_custom_call.1} parent=0
    #allocation2 [shape = 'u8[1024]{0}', space=vmem, size = 0x400, scoped, tag = 'output window, operand 0, single buffered']
    #allocation3 [shape = 's32[1]{0}', space=sflag, size = 0x4, scoped, tag = 'scoped memory for tpu_custom_call.1']
    #allocation4 [shape = 'u8[1024]{0}', space=vmem, size = 0x400, scoped, tag = 'output window, operand 1, single buffered']
    #allocation5 [shape = 's32[1]{0}', space=sflag, size = 0x4, scoped, tag = 'scoped memory for tpu_custom_call.1']
    #allocation6 [shape = 'u8[10240]{0}', space=vmem, size = 0x2800, scoped, tag = 'output window, operand 2, single buffered']
    %11 = vsyncpa [#allocation3], 0
    %12 = vsyncpa [#allocation5], 0
    // Predicated region
    $region2: #{tpu_custom_call.1} parent=1 // pred_check
      _
    $region3: #{tpu_custom_call.1} parent=1 // pred_check_branch
      %14 = sbr.rel (0) target = $region5
    $region4: #{tpu_custom_call.1} parent=1 // pred_region
      _
    $region5: #{tpu_custom_call.1} parent=1 // pred_fallthru
      _
    // Predicated region
    $region6: #{tpu_custom_call.1} parent=1 // pred_check
      _
    $region7: #{tpu_custom_call.1} parent=1 // pred_check_branch
      %16 = sbr.rel (0) target = $region9
    $region8: #{tpu_custom_call.1} parent=1 // pred_region
      _
    $region9: #{tpu_custom_call.1} parent=1 // pred_fallthru
      _
    // Predicated region
    $region10: #{tpu_custom_call.1} parent=1 // pred_check
      _
    $region11: #{tpu_custom_call.1} parent=1 // pred_check_branch
      %18 = sbr.rel (0) target = $region13
    $region12: #{tpu_custom_call.1} parent=1 // pred_region
      _
    $region13: #{tpu_custom_call.1} parent=1 // pred_fallthru
      _
    %v19 = vld [vmem:[%s0] sm:$0x3]
    %v20 = vmul.f32 %v19, %v19
    %vm21 = vcmask 254976
    %v22 = vsel %vm21, %v20, 0.0
    %23 = vadd.xlane.f32.xlu0 %v22
    %v24 = vpop.xlane.xlu0 %23
    %v25 = vmax.f32 %v24, 1e-24
    %v26 = vrsqrt.pop %v25
    %v27 = vmul.f32 %v19, %v26
    %v28 = vld [vmem:[%s1] sm:$0xff]
    %v29 = vld [vmem:[%s1 + $0x8] sm:$0xff]
    %v30 = vld [vmem:[%s1 + $0x10] sm:$0xff]
    %v31 = vld [vmem:[%s1 + $0x18] sm:$0xff]
    %v32 = vld [vmem:[%s1 + $0x20] sm:$0xff]
    %v33 = vld [vmem:[%s1 + $0x28] sm:$0xff]
    %v34 = vld [vmem:[%s1 + $0x30] sm:$0xff]
    %v35 = vld [vmem:[%s1 + $0x38] sm:$0xff]
    %v36 = vld [vmem:[%s1 + $0x40] sm:$0xff]
    %v37 = vld [vmem:[%s1 + $0x48] sm:$0xff]
    %v38 = vld [vmem:[%s1 + $0x50] sm:$0xff]
    %v39 = vld [vmem:[%s1 + $0x58] sm:$0xff]
    %v40 = vld [vmem:[%s1 + $0x60] sm:$0xff]
    %v41 = vld [vmem:[%s1 + $0x68] sm:$0xff]
    %v42 = vld [vmem:[%s1 + $0x70] sm:$0xff]
    %v43 = vld [vmem:[%s1 + $0x78] sm:$0xff]
    %vm44 = vcmask 261120
    %v46 = vsel %vm44, %v27, 0
    %v49 = vsel %vm44, %v28, 0
    %v52 = vsel %vm44, %v29, 0
    %v55 = vsel %vm44, %v30, 0
    %v58 = vsel %vm44, %v31, 0
    %v61 = vsel %vm44, %v32, 0
    %v64 = vsel %vm44, %v33, 0
    %v67 = vsel %vm44, %v34, 0
    %v70 = vsel %vm44, %v35, 0
    %v73 = vsel %vm44, %v36, 0
    %v76 = vsel %vm44, %v37, 0
    %v79 = vsel %vm44, %v38, 0
    %v82 = vsel %vm44, %v39, 0
    %v85 = vsel %vm44, %v40, 0
    %v88 = vsel %vm44, %v41, 0
    %v91 = vsel %vm44, %v42, 0
    %v94 = vsel %vm44, %v43, 0
    %96 = vmatprep.subr.mxu0 0.0
    %97 = vmatpush1.xpose.msra.mxu0 %v49
    %98 = vmatprep.subr.mxu0 0.0
    %99 = vmatpush1.xpose.msra.mxu0 %v52
    %100 = vmatprep.subr.mxu0 0.0
    %101 = vmatpush1.xpose.msra.mxu0 %v55
    %102 = vmatprep.subr.mxu0 0.0
    %103 = vmatpush1.xpose.msra.mxu0 %v58
    %104 = vmatprep.subr.mxu0 0.0
    %105 = vmatpush1.xpose.msra.mxu0 %v61
    %106 = vmatprep.subr.mxu0 0.0
    %107 = vmatpush1.xpose.msra.mxu0 %v64
    %108 = vmatprep.subr.mxu0 0.0
    %109 = vmatpush1.xpose.msra.mxu0 %v67
    %110 = vmatprep.subr.mxu0 0.0
    %111 = vmatpush1.xpose.msra.mxu0 %v70
    %112 = vmatprep.subr.mxu0 0.0
    %113 = vmatpush1.xpose.msra.mxu0 %v73
    %114 = vmatprep.subr.mxu0 0.0
    %115 = vmatpush1.xpose.msra.mxu0 %v76
    %116 = vmatprep.subr.mxu0 0.0
    %117 = vmatpush1.xpose.msra.mxu0 %v79
    %118 = vmatprep.subr.mxu0 0.0
    %119 = vmatpush1.xpose.msra.mxu0 %v82
    %120 = vmatprep.subr.mxu0 0.0
    %121 = vmatpush1.xpose.msra.mxu0 %v85
    %122 = vmatprep.subr.mxu0 0.0
    %123 = vmatpush1.xpose.msra.mxu0 %v88
    %124 = vmatprep.subr.mxu0 0.0
    %125 = vmatpush1.xpose.msra.mxu0 %v91
    %126 = vmatprep.subr.mxu0 0.0
    %127 = vmatpush1.xpose.msra.mxu0 %v94
    %128 = vmatprep.subr.mxu0 0.0
    %129 = vmatpush1.xpose.msra.mxu0 0.0
    %130 = vmatprep.subr.mxu0 0.0
    %131 = vmatpush1.xpose.msra.mxu0 0.0
    %132 = vmatprep.subr.mxu0 0.0
    %133 = vmatpush1.xpose.msra.mxu0 0.0
    %134 = vmatprep.subr.mxu0 0.0
    %135 = vmatpush1.xpose.msra.mxu0 0.0
    %136 = vmatprep.subr.mxu0 0.0
    %137 = vmatpush1.xpose.msra.mxu0 0.0
    %138 = vmatprep.subr.mxu0 0.0
    %139 = vmatpush1.xpose.msra.mxu0 0.0
    %140 = vmatprep.subr.mxu0 0.0
    %141 = vmatpush1.xpose.msra.mxu0 0.0
    %142 = vmatprep.subr.mxu0 0.0
    %143 = vmatpush1.xpose.msra.mxu0 0.0
    %144 = vmatprep.subr.mxu0 0.0
    %145 = vmatpush1.xpose.msra.mxu0 0.0
    %146 = vmatprep.subr.mxu0 0.0
    %147 = vmatpush1.xpose.msra.mxu0 0.0
    %148 = vmatprep.subr.mxu0 0.0
    %149 = vmatpush1.xpose.msra.mxu0 0.0
    %150 = vmatprep.subr.mxu0 0.0
    %151 = vmatpush1.xpose.msra.mxu0 0.0
    %152 = vmatprep.subr.mxu0 0.0
    %153 = vmatpush1.xpose.msra.mxu0 0.0
    %154 = vmatprep.subr.mxu0 0.0
    %155 = vmatpush1.xpose.msra.mxu0 0.0
    %156 = vmatprep.subr.mxu0 0.0
    %157 = vmatpush1.xpose.msra.mxu0 0.0
    %158 = vmatprep.subr.mxu0 0.0
    %159 = vmatpush1.xpose.msra.mxu0 0.0
    %160 = vmatprep.mubr.f32.mxu0 0.0
    %161 = vmatmul.mubr.f32.gmra.mrb[0].mxu0 %v46
    %v162 = vpop.f32.mrb[0].mxu0
    %v163 = vadd.f32 0.0, %v162
    %v164 = vpop.f32.mrb[0].mxu0
    %165 = vdwg.mxu0
    %166 = vst [vmem:[#allocation2] sm:$0x3] %v163
    %v167 = vlaneseq
    %v168 = vand.u32 %v167, 127
    %v169 = vld [vmem:[%s2] sm:$0xff]
    %v170 = vld [vmem:[%s2 + $0x8] sm:$0xff]
    %v171 = vld [vmem:[%s2 + $0x10] sm:$0xff]
    %v172 = vld [vmem:[%s2 + $0x18] sm:$0xff]
    %vm173 = vcmp.lt.s32.totalorder %v168, 16
    %v174 = vsel %vm173, %v163, -inf
    %vm175 = vcmask 1041408
    %v176 = vsel %vm175, %v174, -inf
    %177 = vmax.xlane.f32.xlu0 %v176
    %v178 = vpop.xlane.xlu0 %177
    %vm179 = vcmp.eq.f32.partialorder %v174, %v178
    %v180 = vsel %vm179, %v168, 128
    %v181 = vsel %vm175, %v180, 2147483647
    %v182 = vand.u32 %v181, 65535
    %v183 = vshra.s32 %v181, 16
    %v184 = vcvt.s32.f32 %v182
    %v185 = vcvt.s32.f32 %v183
    %186 = vmin.xlane.f32.xlu0 %v185
    %v187 = vpop.xlane.xlu0 %186
    %vm188 = vcmp.eq.f32.partialorder %v185, %v187
    %v189 = vsel %vm188, %v184, inf
    %190 = vmin.xlane.f32.xlu0 %v189
    %v191 = vpop.xlane.xlu0 %190
    %v192 = vcvt.f32.s32 %v191
    %v193 = vcvt.f32.s32 %v187
    %v194 = vshll.u32 %v193, 16
    %v195 = vadd.s32 %v194, %v192
    %vm196 = vcmask 1024
    %197 = vst.msk [vmem:[#allocation4] sm:$0x3] %vm196, %v178
    %vm198 = vcmp.eq.s32.totalorder %v168, %v195
    %v199 = vsel %vm198, 1, 0
    %v200 = vcvt.s32.f32 %v199
    %vm201 = vcmask 130048
    %v203 = vsel %vm201, %v200, 0
    %205 = vmatprep.subr.mxu0 %v170
    %206 = vmatpush1.msra.mxu0 %v169
    %207 = vmatprep.subr.mxu0 %v172
    %208 = vmatpush1.msra.mxu0 %v171
    %209 = vmatprep.subr.mxu0 0.0
    %210 = vmatpush1.msra.mxu0 0.0
    %211 = vmatprep.subr.mxu0 0.0
    %212 = vmatpush1.msra.mxu0 0.0
    %213 = vmatprep.subr.mxu0 0.0
    %214 = vmatpush1.msra.mxu0 0.0
    %215 = vmatprep.subr.mxu0 0.0
    %216 = vmatpush1.msra.mxu0 0.0
    %217 = vmatprep.subr.mxu0 0.0
    %218 = vmatpush1.msra.mxu0 0.0
    %219 = vmatprep.subr.mxu0 0.0
    %220 = vmatpush1.msra.mxu0 0.0
    %221 = vmatprep.subr.mxu0 0.0
    %222 = vmatpush1.msra.mxu0 0.0
    %223 = vmatprep.subr.mxu0 0.0
    %224 = vmatpush1.msra.mxu0 0.0
    %225 = vmatprep.subr.mxu0 0.0
    %226 = vmatpush1.msra.mxu0 0.0
    %227 = vmatprep.subr.mxu0 0.0
    %228 = vmatpush1.msra.mxu0 0.0
    %229 = vmatprep.subr.mxu0 0.0
    %230 = vmatpush1.msra.mxu0 0.0
    %231 = vmatprep.subr.mxu0 0.0
    %232 = vmatpush1.msra.mxu0 0.0
    %233 = vmatprep.subr.mxu0 0.0
    %234 = vmatpush1.msra.mxu0 0.0
    %235 = vmatprep.subr.mxu0 0.0
    %236 = vmatpush1.msra.mxu0 0.0
    %237 = vmatprep.subr.mxu0 0.0
    %238 = vmatpush1.msra.mxu0 0.0
    %239 = vmatprep.subr.mxu0 0.0
    %240 = vmatpush1.msra.mxu0 0.0
    %241 = vmatprep.subr.mxu0 0.0
    %242 = vmatpush1.msra.mxu0 0.0
    %243 = vmatprep.subr.mxu0 0.0
    %244 = vmatpush1.msra.mxu0 0.0
    %245 = vmatprep.subr.mxu0 0.0
    %246 = vmatpush1.msra.mxu0 0.0
    %247 = vmatprep.subr.mxu0 0.0
    %248 = vmatpush1.msra.mxu0 0.0
    %249 = vmatprep.subr.mxu0 0.0
    %250 = vmatpush1.msra.mxu0 0.0
    %251 = vmatprep.subr.mxu0 0.0
    %252 = vmatpush1.msra.mxu0 0.0
    %253 = vmatprep.subr.mxu0 0.0
    %254 = vmatpush1.msra.mxu0 0.0
    %255 = vmatprep.subr.mxu0 0.0
    %256 = vmatpush1.msra.mxu0 0.0
    %257 = vmatprep.subr.mxu0 0.0
    %258 = vmatpush1.msra.mxu0 0.0
    %259 = vmatprep.subr.mxu0 0.0
    %260 = vmatpush1.msra.mxu0 0.0
    %261 = vmatprep.subr.mxu0 0.0
    %262 = vmatpush1.msra.mxu0 0.0
    %263 = vmatprep.subr.mxu0 0.0
    %264 = vmatpush1.msra.mxu0 0.0
    %265 = vmatprep.subr.mxu0 0.0
    %266 = vmatpush1.msra.mxu0 0.0
    %267 = vmatprep.subr.mxu0 0.0
    %268 = vmatpush1.msra.mxu0 0.0
    %269 = vmatprep.mubr.f32.mxu0 0.0
    %270 = vmatmul.mubr.f32.gmra.mrb[0].mxu0 %v203
    %v271 = vpop.f32.mrb[0].mxu0
    %v272 = vadd.f32 0.0, %v271
    %v273 = vpop.f32.mrb[0].mxu0
    %v274 = vadd.f32 0.0, %v273
    %275 = vdwg.mxu0
    %v278 = vcombine.low %v272, %v274
    %v280 = vunpack.c.l.s4 1983009808
    %v281 = vunpack.c.0.s8 %v280
    %v282 = vlaneseq
    %v283 = vshrl.u32 %v282, 7
    %v284 = vsub.s32 %v281, %v283
    %v285 = vrot.slane %v278, %v284
    %287 = vst [vmem:[#allocation6] sm:$0xf] %v285
    %v288 = vsel %vm198, -inf, %v174
    %v289 = vsel %vm175, %v288, -inf
    %290 = vmax.xlane.f32.xlu0 %v289
    %v291 = vpop.xlane.xlu0 %290
    %vm292 = vcmp.eq.f32.partialorder %v288, %v291
    %v293 = vsel %vm292, %v168, 128
    %v294 = vsel %vm175, %v293, 2147483647
    %v295 = vand.u32 %v294, 65535
    %v296 = vshra.s32 %v294, 16
    %v297 = vcvt.s32.f32 %v295
    %v298 = vcvt.s32.f32 %v296
    %299 = vmin.xlane.f32.xlu0 %v298
    %v300 = vpop.xlane.xlu0 %299
    %vm301 = vcmp.eq.f32.partialorder %v298, %v300
    %v302 = vsel %vm301, %v297, inf
    %303 = vmin.xlane.f32.xlu0 %v302
    %v304 = vpop.xlane.xlu0 %303
    %v305 = vcvt.f32.s32 %v304
    %v306 = vcvt.f32.s32 %v300
    %v307 = vshll.u32 %v306, 16
    %v308 = vadd.s32 %v307, %v305
    %vm309 = vcmask 9224
    %310 = vst.msk [vmem:[#allocation4] sm:$0x3] %vm309, %v291
    %vm311 = vcmp.eq.s32.totalorder %v168, %v308
    %v312 = vsel %vm311, 1, 0
    %v313 = vcvt.s32.f32 %v312
    %v315 = vsel %vm201, %v313, 0
    %317 = vmatprep.subr.mxu0 %v170
    %318 = vmatpush1.msra.mxu0 %v169
    %319 = vmatprep.subr.mxu0 %v172
    %320 = vmatpush1.msra.mxu0 %v171
    %321 = vmatprep.subr.mxu0 0.0
    %322 = vmatpush1.msra.mxu0 0.0
    %323 = vmatprep.subr.mxu0 0.0
    %324 = vmatpush1.msra.mxu0 0.0
    %325 = vmatprep.subr.mxu0 0.0
    %326 = vmatpush1.msra.mxu0 0.0
    %327 = vmatprep.subr.mxu0 0.0
    %328 = vmatpush1.msra.mxu0 0.0
    %329 = vmatprep.subr.mxu0 0.0
    %330 = vmatpush1.msra.mxu0 0.0
    %331 = vmatprep.subr.mxu0 0.0
    %332 = vmatpush1.msra.mxu0 0.0
    %333 = vmatprep.subr.mxu0 0.0
    %334 = vmatpush1.msra.mxu0 0.0
    %335 = vmatprep.subr.mxu0 0.0
    %336 = vmatpush1.msra.mxu0 0.0
    %337 = vmatprep.subr.mxu0 0.0
    %338 = vmatpush1.msra.mxu0 0.0
    %339 = vmatprep.subr.mxu0 0.0
    %340 = vmatpush1.msra.mxu0 0.0
    %341 = vmatprep.subr.mxu0 0.0
    %342 = vmatpush1.msra.mxu0 0.0
    %343 = vmatprep.subr.mxu0 0.0
    %344 = vmatpush1.msra.mxu0 0.0
    %345 = vmatprep.subr.mxu0 0.0
    %346 = vmatpush1.msra.mxu0 0.0
    %347 = vmatprep.subr.mxu0 0.0
    %348 = vmatpush1.msra.mxu0 0.0
    %349 = vmatprep.subr.mxu0 0.0
    %350 = vmatpush1.msra.mxu0 0.0
    %351 = vmatprep.subr.mxu0 0.0
    %352 = vmatpush1.msra.mxu0 0.0
    %353 = vmatprep.subr.mxu0 0.0
    %354 = vmatpush1.msra.mxu0 0.0
    %355 = vmatprep.subr.mxu0 0.0
    %356 = vmatpush1.msra.mxu0 0.0
    %357 = vmatprep.subr.mxu0 0.0
    %358 = vmatpush1.msra.mxu0 0.0
    %359 = vmatprep.subr.mxu0 0.0
    %360 = vmatpush1.msra.mxu0 0.0
    %361 = vmatprep.subr.mxu0 0.0
    %362 = vmatpush1.msra.mxu0 0.0
    %363 = vmatprep.subr.mxu0 0.0
    %364 = vmatpush1.msra.mxu0 0.0
    %365 = vmatprep.subr.mxu0 0.0
    %366 = vmatpush1.msra.mxu0 0.0
    %367 = vmatprep.subr.mxu0 0.0
    %368 = vmatpush1.msra.mxu0 0.0
    %369 = vmatprep.subr.mxu0 0.0
    %370 = vmatpush1.msra.mxu0 0.0
    %371 = vmatprep.subr.mxu0 0.0
    %372 = vmatpush1.msra.mxu0 0.0
    %373 = vmatprep.subr.mxu0 0.0
    %374 = vmatpush1.msra.mxu0 0.0
    %375 = vmatprep.subr.mxu0 0.0
    %376 = vmatpush1.msra.mxu0 0.0
    %377 = vmatprep.subr.mxu0 0.0
    %378 = vmatpush1.msra.mxu0 0.0
    %379 = vmatprep.subr.mxu0 0.0
    %380 = vmatpush1.msra.mxu0 0.0
    %381 = vmatprep.mubr.f32.mxu0 0.0
    %382 = vmatmul.mubr.f32.gmra.mrb[0].mxu0 %v315
    %v383 = vpop.f32.mrb[0].mxu0
    %v384 = vadd.f32 0.0, %v383
    %v385 = vpop.f32.mrb[0].mxu0
    %v386 = vadd.f32 0.0, %v385
    %387 = vdwg.mxu0
    %v390 = vcombine.low %v384, %v386
    %v392 = vunpack.c.l.s4 1983009808
    %v393 = vunpack.c.0.s8 %v392
    %v394 = vlaneseq
    %v395 = vshrl.u32 %v394, 7
    %v396 = vsub.s32 %v393, %v395
    %v397 = vrot.slane %v390, %v396
    %399 = vst [vmem:[#allocation6 + $0x4] sm:$0xf] %v397
    %v400 = vsel %vm311, -inf, %v288
    %v401 = vsel %vm175, %v400, -inf
    %402 = vmax.xlane.f32.xlu0 %v401
    %v403 = vpop.xlane.xlu0 %402
    %vm404 = vcmp.eq.f32.partialorder %v400, %v403
    %v405 = vsel %vm404, %v168, 128
    %v406 = vsel %vm175, %v405, 2147483647
    %v407 = vand.u32 %v406, 65535
    %v408 = vshra.s32 %v406, 16
    %v409 = vcvt.s32.f32 %v407
    %v410 = vcvt.s32.f32 %v408
    %411 = vmin.xlane.f32.xlu0 %v410
    %v412 = vpop.xlane.xlu0 %411
    %vm413 = vcmp.eq.f32.partialorder %v410, %v412
    %v414 = vsel %vm413, %v409, inf
    %415 = vmin.xlane.f32.xlu0 %v414
    %v416 = vpop.xlane.xlu0 %415
    %v417 = vcvt.f32.s32 %v416
    %v418 = vcvt.f32.s32 %v412
    %v419 = vshll.u32 %v418, 16
    %v420 = vadd.s32 %v419, %v417
    %vm421 = vcmask 17424
    %422 = vst.msk [vmem:[#allocation4] sm:$0x3] %vm421, %v403
    %vm423 = vcmp.eq.s32.totalorder %v168, %v420
    %v424 = vsel %vm423, 1, 0
    %v425 = vcvt.s32.f32 %v424
    %v427 = vsel %vm201, %v425, 0
    %429 = vmatprep.subr.mxu0 %v170
    %430 = vmatpush1.msra.mxu0 %v169
    %431 = vmatprep.subr.mxu0 %v172
    %432 = vmatpush1.msra.mxu0 %v171
    %433 = vmatprep.subr.mxu0 0.0
    %434 = vmatpush1.msra.mxu0 0.0
    %435 = vmatprep.subr.mxu0 0.0
    %436 = vmatpush1.msra.mxu0 0.0
    %437 = vmatprep.subr.mxu0 0.0
    %438 = vmatpush1.msra.mxu0 0.0
    %439 = vmatprep.subr.mxu0 0.0
    %440 = vmatpush1.msra.mxu0 0.0
    %441 = vmatprep.subr.mxu0 0.0
    %442 = vmatpush1.msra.mxu0 0.0
    %443 = vmatprep.subr.mxu0 0.0
    %444 = vmatpush1.msra.mxu0 0.0
    %445 = vmatprep.subr.mxu0 0.0
    %446 = vmatpush1.msra.mxu0 0.0
    %447 = vmatprep.subr.mxu0 0.0
    %448 = vmatpush1.msra.mxu0 0.0
    %449 = vmatprep.subr.mxu0 0.0
    %450 = vmatpush1.msra.mxu0 0.0
    %451 = vmatprep.subr.mxu0 0.0
    %452 = vmatpush1.msra.mxu0 0.0
    %453 = vmatprep.subr.mxu0 0.0
    %454 = vmatpush1.msra.mxu0 0.0
    %455 = vmatprep.subr.mxu0 0.0
    %456 = vmatpush1.msra.mxu0 0.0
    %457 = vmatprep.subr.mxu0 0.0
    %458 = vmatpush1.msra.mxu0 0.0
    %459 = vmatprep.subr.mxu0 0.0
    %460 = vmatpush1.msra.mxu0 0.0
    %461 = vmatprep.subr.mxu0 0.0
    %462 = vmatpush1.msra.mxu0 0.0
    %463 = vmatprep.subr.mxu0 0.0
    %464 = vmatpush1.msra.mxu0 0.0
    %465 = vmatprep.subr.mxu0 0.0
    %466 = vmatpush1.msra.mxu0 0.0
    %467 = vmatprep.subr.mxu0 0.0
    %468 = vmatpush1.msra.mxu0 0.0
    %469 = vmatprep.subr.mxu0 0.0
    %470 = vmatpush1.msra.mxu0 0.0
    %471 = vmatprep.subr.mxu0 0.0
    %472 = vmatpush1.msra.mxu0 0.0
    %473 = vmatprep.subr.mxu0 0.0
    %474 = vmatpush1.msra.mxu0 0.0
    %475 = vmatprep.subr.mxu0 0.0
    %476 = vmatpush1.msra.mxu0 0.0
    %477 = vmatprep.subr.mxu0 0.0
    %478 = vmatpush1.msra.mxu0 0.0
    %479 = vmatprep.subr.mxu0 0.0
    %480 = vmatpush1.msra.mxu0 0.0
    %481 = vmatprep.subr.mxu0 0.0
    %482 = vmatpush1.msra.mxu0 0.0
    %483 = vmatprep.subr.mxu0 0.0
    %484 = vmatpush1.msra.mxu0 0.0
    %485 = vmatprep.subr.mxu0 0.0
    %486 = vmatpush1.msra.mxu0 0.0
    %487 = vmatprep.subr.mxu0 0.0
    %488 = vmatpush1.msra.mxu0 0.0
    %489 = vmatprep.subr.mxu0 0.0
    %490 = vmatpush1.msra.mxu0 0.0
    %491 = vmatprep.subr.mxu0 0.0
    %492 = vmatpush1.msra.mxu0 0.0
    %493 = vmatprep.mubr.f32.mxu0 0.0
    %494 = vmatmul.mubr.f32.gmra.mrb[0].mxu0 %v427
    %v495 = vpop.f32.mrb[0].mxu0
    %v496 = vadd.f32 0.0, %v495
    %v497 = vpop.f32.mrb[0].mxu0
    %v498 = vadd.f32 0.0, %v497
    %499 = vdwg.mxu0
    %v502 = vcombine.low %v496, %v498
    %v504 = vunpack.c.l.s4 1983009808
    %v505 = vunpack.c.0.s8 %v504
    %v506 = vlaneseq
    %v507 = vshrl.u32 %v506, 7
    %v508 = vsub.s32 %v505, %v507
    %v509 = vrot.slane %v502, %v508
    %511 = vst [vmem:[#allocation6 + $0x8] sm:$0xf] %v509
    %v512 = vsel %vm423, -inf, %v400
    %v513 = vsel %vm175, %v512, -inf
    %514 = vmax.xlane.f32.xlu0 %v513
    %v515 = vpop.xlane.xlu0 %514
    %vm516 = vcmp.eq.f32.partialorder %v512, %v515
    %v517 = vsel %vm516, %v168, 128
    %v518 = vsel %vm175, %v517, 2147483647
    %v519 = vand.u32 %v518, 65535
    %v520 = vshra.s32 %v518, 16
    %v521 = vcvt.s32.f32 %v519
    %v522 = vcvt.s32.f32 %v520
    %523 = vmin.xlane.f32.xlu0 %v522
    %v524 = vpop.xlane.xlu0 %523
    %vm525 = vcmp.eq.f32.partialorder %v522, %v524
    %v526 = vsel %vm525, %v521, inf
    %527 = vmin.xlane.f32.xlu0 %v526
    %v528 = vpop.xlane.xlu0 %527
    %v529 = vcvt.f32.s32 %v528
    %v530 = vcvt.f32.s32 %v524
    %v531 = vshll.u32 %v530, 16
    %v532 = vadd.s32 %v531, %v529
    %vm533 = vcmask 25624
    %534 = vst.msk [vmem:[#allocation4] sm:$0x3] %vm533, %v515
    %vm535 = vcmp.eq.s32.totalorder %v168, %v532
    %v536 = vsel %vm535, 1, 0
    %v537 = vcvt.s32.f32 %v536
    %v539 = vsel %vm201, %v537, 0
    %541 = vmatprep.subr.mxu0 %v170
    %542 = vmatpush1.msra.mxu0 %v169
    %543 = vmatprep.subr.mxu0 %v172
    %544 = vmatpush1.msra.mxu0 %v171
    %545 = vmatprep.subr.mxu0 0.0
    %546 = vmatpush1.msra.mxu0 0.0
    %547 = vmatprep.subr.mxu0 0.0
    %548 = vmatpush1.msra.mxu0 0.0
    %549 = vmatprep.subr.mxu0 0.0
    %550 = vmatpush1.msra.mxu0 0.0
    %551 = vmatprep.subr.mxu0 0.0
    %552 = vmatpush1.msra.mxu0 0.0
    %553 = vmatprep.subr.mxu0 0.0
    %554 = vmatpush1.msra.mxu0 0.0
    %555 = vmatprep.subr.mxu0 0.0
    %556 = vmatpush1.msra.mxu0 0.0
    %557 = vmatprep.subr.mxu0 0.0
    %558 = vmatpush1.msra.mxu0 0.0
    %559 = vmatprep.subr.mxu0 0.0
    %560 = vmatpush1.msra.mxu0 0.0
    %561 = vmatprep.subr.mxu0 0.0
    %562 = vmatpush1.msra.mxu0 0.0
    %563 = vmatprep.subr.mxu0 0.0
    %564 = vmatpush1.msra.mxu0 0.0
    %565 = vmatprep.subr.mxu0 0.0
    %566 = vmatpush1.msra.mxu0 0.0
    %567 = vmatprep.subr.mxu0 0.0
    %568 = vmatpush1.msra.mxu0 0.0
    %569 = vmatprep.subr.mxu0 0.0
    %570 = vmatpush1.msra.mxu0 0.0
    %571 = vmatprep.subr.mxu0 0.0
    %572 = vmatpush1.msra.mxu0 0.0
    %573 = vmatprep.subr.mxu0 0.0
    %574 = vmatpush1.msra.mxu0 0.0
    %575 = vmatprep.subr.mxu0 0.0
    %576 = vmatpush1.msra.mxu0 0.0
    %577 = vmatprep.subr.mxu0 0.0
    %578 = vmatpush1.msra.mxu0 0.0
    %579 = vmatprep.subr.mxu0 0.0
    %580 = vmatpush1.msra.mxu0 0.0
    %581 = vmatprep.subr.mxu0 0.0
    %582 = vmatpush1.msra.mxu0 0.0
    %583 = vmatprep.subr.mxu0 0.0
    %584 = vmatpush1.msra.mxu0 0.0
    %585 = vmatprep.subr.mxu0 0.0
    %586 = vmatpush1.msra.mxu0 0.0
    %587 = vmatprep.subr.mxu0 0.0
    %588 = vmatpush1.msra.mxu0 0.0
    %589 = vmatprep.subr.mxu0 0.0
    %590 = vmatpush1.msra.mxu0 0.0
    %591 = vmatprep.subr.mxu0 0.0
    %592 = vmatpush1.msra.mxu0 0.0
    %593 = vmatprep.subr.mxu0 0.0
    %594 = vmatpush1.msra.mxu0 0.0
    %595 = vmatprep.subr.mxu0 0.0
    %596 = vmatpush1.msra.mxu0 0.0
    %597 = vmatprep.subr.mxu0 0.0
    %598 = vmatpush1.msra.mxu0 0.0
    %599 = vmatprep.subr.mxu0 0.0
    %600 = vmatpush1.msra.mxu0 0.0
    %601 = vmatprep.subr.mxu0 0.0
    %602 = vmatpush1.msra.mxu0 0.0
    %603 = vmatprep.subr.mxu0 0.0
    %604 = vmatpush1.msra.mxu0 0.0
    %605 = vmatprep.mubr.f32.mxu0 0.0
    %606 = vmatmul.mubr.f32.gmra.mrb[0].mxu0 %v539
    %v607 = vpop.f32.mrb[0].mxu0
    %v608 = vadd.f32 0.0, %v607
    %v609 = vpop.f32.mrb[0].mxu0
    %v610 = vadd.f32 0.0, %v609
    %611 = vdwg.mxu0
    %v614 = vcombine.low %v608, %v610
    %v616 = vunpack.c.l.s4 1983009808
    %v617 = vunpack.c.0.s8 %v616
    %v618 = vlaneseq
    %v619 = vshrl.u32 %v618, 7
    %v620 = vsub.s32 %v617, %v619
    %v621 = vrot.slane %v614, %v620
    %623 = vst [vmem:[#allocation6 + $0xc] sm:$0xf] %v621
    %v624 = vsel %vm535, -inf, %v512
    %v625 = vsel %vm175, %v624, -inf
    %626 = vmax.xlane.f32.xlu0 %v625
    %v627 = vpop.xlane.xlu0 %626
    %vm628 = vcmp.eq.f32.partialorder %v624, %v627
    %v629 = vsel %vm628, %v168, 128
    %v630 = vsel %vm175, %v629, 2147483647
    %v631 = vand.u32 %v630, 65535
    %v632 = vshra.s32 %v630, 16
    %v633 = vcvt.s32.f32 %v631
    %v634 = vcvt.s32.f32 %v632
    %635 = vmin.xlane.f32.xlu0 %v634
    %v636 = vpop.xlane.xlu0 %635
    %vm637 = vcmp.eq.f32.partialorder %v634, %v636
    %v638 = vsel %vm637, %v633, inf
    %639 = vmin.xlane.f32.xlu0 %v638
    %v640 = vpop.xlane.xlu0 %639
    %v641 = vcvt.f32.s32 %v640
    %v642 = vcvt.f32.s32 %v636
    %v643 = vshll.u32 %v642, 16
    %v644 = vadd.s32 %v643, %v641
    %vm645 = vcmask 33824
    %646 = vst.msk [vmem:[#allocation4] sm:$0x3] %vm645, %v627
    %vm647 = vcmp.eq.s32.totalorder %v168, %v644
    %v648 = vsel %vm647, 1, 0
    %v649 = vcvt.s32.f32 %v648
    %v651 = vsel %vm201, %v649, 0
    %653 = vmatprep.subr.mxu0 %v170
    %654 = vmatpush1.msra.mxu0 %v169
    %655 = vmatprep.subr.mxu0 %v172
    %656 = vmatpush1.msra.mxu0 %v171
    %657 = vmatprep.subr.mxu0 0.0
    %658 = vmatpush1.msra.mxu0 0.0
    %659 = vmatprep.subr.mxu0 0.0
    %660 = vmatpush1.msra.mxu0 0.0
    %661 = vmatprep.subr.mxu0 0.0
    %662 = vmatpush1.msra.mxu0 0.0
    %663 = vmatprep.subr.mxu0 0.0
    %664 = vmatpush1.msra.mxu0 0.0
    %665 = vmatprep.subr.mxu0 0.0
    %666 = vmatpush1.msra.mxu0 0.0
    %667 = vmatprep.subr.mxu0 0.0
    %668 = vmatpush1.msra.mxu0 0.0
    %669 = vmatprep.subr.mxu0 0.0
    %670 = vmatpush1.msra.mxu0 0.0
    %671 = vmatprep.subr.mxu0 0.0
    %672 = vmatpush1.msra.mxu0 0.0
    %673 = vmatprep.subr.mxu0 0.0
    %674 = vmatpush1.msra.mxu0 0.0
    %675 = vmatprep.subr.mxu0 0.0
    %676 = vmatpush1.msra.mxu0 0.0
    %677 = vmatprep.subr.mxu0 0.0
    %678 = vmatpush1.msra.mxu0 0.0
    %679 = vmatprep.subr.mxu0 0.0
    %680 = vmatpush1.msra.mxu0 0.0
    %681 = vmatprep.subr.mxu0 0.0
    %682 = vmatpush1.msra.mxu0 0.0
    %683 = vmatprep.subr.mxu0 0.0
    %684 = vmatpush1.msra.mxu0 0.0
    %685 = vmatprep.subr.mxu0 0.0
    %686 = vmatpush1.msra.mxu0 0.0
    %687 = vmatprep.subr.mxu0 0.0
    %688 = vmatpush1.msra.mxu0 0.0
    %689 = vmatprep.subr.mxu0 0.0
    %690 = vmatpush1.msra.mxu0 0.0
    %691 = vmatprep.subr.mxu0 0.0
    %692 = vmatpush1.msra.mxu0 0.0
    %693 = vmatprep.subr.mxu0 0.0
    %694 = vmatpush1.msra.mxu0 0.0
    %695 = vmatprep.subr.mxu0 0.0
    %696 = vmatpush1.msra.mxu0 0.0
    %697 = vmatprep.subr.mxu0 0.0
    %698 = vmatpush1.msra.mxu0 0.0
    %699 = vmatprep.subr.mxu0 0.0
    %700 = vmatpush1.msra.mxu0 0.0
    %701 = vmatprep.subr.mxu0 0.0
    %702 = vmatpush1.msra.mxu0 0.0
    %703 = vmatprep.subr.mxu0 0.0
    %704 = vmatpush1.msra.mxu0 0.0
    %705 = vmatprep.subr.mxu0 0.0
    %706 = vmatpush1.msra.mxu0 0.0
    %707 = vmatprep.subr.mxu0 0.0
    %708 = vmatpush1.msra.mxu0 0.0
    %709 = vmatprep.subr.mxu0 0.0
    %710 = vmatpush1.msra.mxu0 0.0
    %711 = vmatprep.subr.mxu0 0.0
    %712 = vmatpush1.msra.mxu0 0.0
    %713 = vmatprep.subr.mxu0 0.0
    %714 = vmatpush1.msra.mxu0 0.0
    %715 = vmatprep.subr.mxu0 0.0
    %716 = vmatpush1.msra.mxu0 0.0
    %717 = vmatprep.mubr.f32.mxu0 0.0
    %718 = vmatmul.mubr.f32.gmra.mrb[0].mxu0 %v651
    %v719 = vpop.f32.mrb[0].mxu0
    %v720 = vadd.f32 0.0, %v719
    %v721 = vpop.f32.mrb[0].mxu0
    %v722 = vadd.f32 0.0, %v721
    %723 = vdwg.mxu0
    %v726 = vcombine.low %v720, %v722
    %v728 = vunpack.c.l.s4 1983009808
    %v729 = vunpack.c.0.s8 %v728
    %v730 = vlaneseq
    %v731 = vshrl.u32 %v730, 7
    %v732 = vsub.s32 %v729, %v731
    %v733 = vrot.slane %v726, %v732
    %735 = vst [vmem:[#allocation6 + $0x10] sm:$0xf] %v733
    // Predicated region
    $region14: #{tpu_custom_call.1} parent=1 // pred_check
      _
    $region15: #{tpu_custom_call.1} parent=1 // pred_check_branch
      %737 = sbr.rel (0) target = $region17
    $region16: #{tpu_custom_call.1} parent=1 // pred_region
      %s739 = ssub.s32 32, 32
      %740 = vsyncadd [#allocation3], %s739
      %s742 = sshll.u32 [#allocation2], 4
      %s743 = int_to_ptr.vmem [resolvable:$true] %s742
      %745 = dma.vmem_to_hbm [thread:$0]  %s743, 32, %s3, [#allocation3]
    $region17: #{tpu_custom_call.1} parent=1 // pred_fallthru
      _
    // Predicated region
    $region18: #{tpu_custom_call.1} parent=1 // pred_check
      _
    $region19: #{tpu_custom_call.1} parent=1 // pred_check_branch
      %747 = sbr.rel (0) target = $region21
    $region20: #{tpu_custom_call.1} parent=1 // pred_region
      %s749 = ssub.s32 32, 32
      %750 = vsyncadd [#allocation5], %s749
      %s752 = sshll.u32 [#allocation4], 4
      %s753 = int_to_ptr.vmem [resolvable:$true] %s752
      %755 = dma.vmem_to_hbm [thread:$0]  %s753, 32, %s4, [#allocation5]
    $region21: #{tpu_custom_call.1} parent=1 // pred_fallthru
      _
    // Predicated region
    $region22: #{tpu_custom_call.1} parent=1 // pred_check
      _
    $region23: #{tpu_custom_call.1} parent=1 // pred_check_branch
      %757 = sbr.rel (0) target = $region25
    $region24: #{tpu_custom_call.1} parent=1 // pred_region
      %s759 = ssub.s32 320, 320
      %760 = vsyncadd [#allocation5], %s759
      %s762 = sshll.u32 [#allocation6], 4
      %s763 = int_to_ptr.vmem [resolvable:$true] %s762
      %765 = dma.vmem_to_hbm [thread:$0]  %s763, 320, %s5, [#allocation5]
    $region25: #{tpu_custom_call.1} parent=1 // pred_fallthru
      _
    // Predicated region
    $region26: #{tpu_custom_call.1} parent=1 // pred_check
      _
    $region27: #{tpu_custom_call.1} parent=1 // pred_check_branch
      %767 = sbr.rel (0) target = $region29
    $region28: #{tpu_custom_call.1} parent=1 // pred_region
      %768 = dma.done [#allocation3], 32
    $region29: #{tpu_custom_call.1} parent=1 // pred_fallthru
      _
    // Predicated region
    $region30: #{tpu_custom_call.1} parent=1 // pred_check
      _
    $region31: #{tpu_custom_call.1} parent=1 // pred_check_branch
      %770 = sbr.rel (0) target = $region33
    $region32: #{tpu_custom_call.1} parent=1 // pred_region
      %771 = dma.done [#allocation5], 32
    $region33: #{tpu_custom_call.1} parent=1 // pred_fallthru
      _
    // Predicated region
    $region34: #{tpu_custom_call.1} parent=1 // pred_check
      _
    $region35: #{tpu_custom_call.1} parent=1 // pred_check_branch
      %773 = sbr.rel (0) target = $region37
    $region36: #{tpu_custom_call.1} parent=1 // pred_region
      %774 = dma.done [#allocation5], 320
    $region37: #{tpu_custom_call.1} parent=1 // pred_fallthru
      _
    %775 = vsyncpa [#allocation3], 1
    %776 = vsyncpa [#allocation5], 1

</llo_original>
